<compile_context>
chip_gen: v5e
topology: v5e:2x2
jax: 0.10.0
libtpu: 0.0.40
codegen_flags: <defaults>
</compile_context>

<pallas_src>
import jax
import jax.numpy as jnp
from jax.experimental import pallas as pl
from jax.experimental.pallas import tpu as pltpu


def discriminator_kernel(x_ref,
                         w1_ref, b1_ref,
                         w2_ref, b2_ref,
                         w3_ref, b3_ref,
                         w4_ref, b4_ref,
                         o_ref):
    def leaky_relu(h):
        return jnp.where(h > 0, h, 0.2 * h)

    # Layer 1: cast the f32 x block to bf16 in-kernel (no extra HBM pass),
    # MXU matmul with f32 accumulation, f32 bias-add / leaky_relu on the VPU.
    x = x_ref[...].astype(jnp.bfloat16)
    h = jnp.dot(x, w1_ref[...], preferred_element_type=jnp.float32)
    h = leaky_relu(h + b1_ref[...])
    # TODO(synk): nn.Dropout(0.25) is identity in eval mode; training-mode
    # stochastic masking (pltpu.prng_random_bits) intentionally omitted.

    h = jnp.dot(h.astype(jnp.bfloat16), w2_ref[...],
                preferred_element_type=jnp.float32)
    h = leaky_relu(h + b2_ref[...])

    h = jnp.dot(h.astype(jnp.bfloat16), w3_ref[...],
                preferred_element_type=jnp.float32)
    h = leaky_relu(h + b3_ref[...])

    # Final layer: 128-wide padded w4 for the MXU; only the real output
    # column(s) are biased and written back to HBM.
    out = jnp.dot(h.astype(jnp.bfloat16), w4_ref[...],
                  preferred_element_type=jnp.float32)
    n_real = o_ref.shape[-1]
    o_ref[...] = (out[:, :n_real] + b4_ref[...]).astype(o_ref.dtype)


def _round_up(n, m):
    return ((n + m - 1) // m) * m


def discriminator_forward(x, params, *, batch_tile=1024):
    """x: (B, C, H, W) with C*H*W == 784. params: (w1,b1,...,w4,b4) with
    wK as (in, out) float32 and bK as (1, out) float32."""
    B = x.shape[0]
    K = 28 * 28
    x2d = x.reshape(B, K).astype(jnp.float32)
    w1, b1, w2, b2, w3, b3, w4, b4 = params
    out_dim = w4.shape[1]

    # ---- pad hidden/output feature dims to multiples of 128 (MXU / lane
    # density); padding is exact (zero cols/rows, leaky_relu(0)=0).  The input
    # dim K=784 and the HBM output stay UNpadded. ----
    d1p = _round_up(w1.shape[1], 128)
    d2p = _round_up(w2.shape[1], 128)
    d3p = _round_up(w3.shape[1], 128)
    d4p = _round_up(out_dim, 128)          # in-kernel matmul width only

    def pad2(a, rows, cols):
        return jnp.pad(a, ((0, rows - a.shape[0]), (0, cols - a.shape[1])))

    # Weights in bf16 for the MXU; biases stay f32 for the VPU add.
    w1p = pad2(w1, K, d1p).astype(jnp.bfloat16)
    w2p = pad2(w2, d1p, d2p).astype(jnp.bfloat16)
    w3p = pad2(w3, d2p, d3p).astype(jnp.bfloat16)
    w4p = pad2(w4, d3p, d4p).astype(jnp.bfloat16)
    b1p = pad2(b1, 1, d1p).astype(jnp.float32)
    b2p = pad2(b2, 1, d2p).astype(jnp.float32)
    b3p = pad2(b3, 1, d3p).astype(jnp.float32)
    b4p = b4.astype(jnp.float32)           # (1, out_dim): only real cols stored

    # ---- batch tile selection --------------------------------------------
    bt = _round_up(max(int(batch_tile), 16), 16)       # force multiple of 16
    TB = min(bt, _round_up(B, 16))
    if B > 8 * 128:
        # Keep >= ~8 grid steps (>= ~4 per TC on v7x megacore) for pipeline
        # depth, but never drop below a 128-row tile (HBM-roofline friendly).
        depth_tb = _round_up(-(-B // 8), 16)
        TB = min(TB, max(depth_tb, 128))
    TB = max(TB, 16)
    Bp = _round_up(B, TB)

    # Row-only zero pad of the batch (no K pad, no dtype-cast pass over x).
    xp = x2d if Bp == B else jnp.pad(x2d, ((0, Bp - B), (0, 0)))

    grid = (Bp // TB,)

    def resident(shape):
        # Constant index_map + single buffering: DMA'd once, VMEM-resident.
        return pl.BlockSpec(shape, lambda i: (0, 0),
                            pipeline_mode=pl.Buffered(1))

    in_specs = [
        pl.BlockSpec((TB, K), lambda i: (i, 0)),   # x: pipelined over batch
        resident(w1p.shape), resident(b1p.shape),
        resident(w2p.shape), resident(b2p.shape),
        resident(w3p.shape), resident(b3p.shape),
        resident(w4p.shape), resident(b4p.shape),
    ]
    out_spec = pl.BlockSpec((TB, out_dim), lambda i: (i, 0))

    flops = 2 * Bp * (K * d1p + d1p * d2p + d2p * d3p + d3p * d4p)
    bytes_accessed = (
        Bp * K * 4                                              # x read (f32)
        + (w1p.size + w2p.size + w3p.size + w4p.size) * 2       # bf16 weights
        + (b1p.size + b2p.size + b3p.size + b4p.size) * 4
        + Bp * out_dim * 4                                      # out write
    )

    # Scoped-VMEM estimate: double-buffered x/out blocks, single-buffered
    # weights/biases, plus live activation temporaries (with headroom).
    d_max = max(d1p, d2p, d3p, d4p)
    vmem_est = (
        2 * TB * K * 4
        + 2 * TB * out_dim * 4
        + 2 * (w1p.size + w2p.size + w3p.size + w4p.size)
        + 4 * (b1p.size + b2p.size + b3p.size + b4p.size)
        + 6 * TB * d_max * 4
    )
    cp_kwargs = dict(dimension_semantics=("parallel",))
    if vmem_est > 12 * 1024 * 1024:
        # Caller pushed batch_tile past v5e's 16 MiB scoped-VMEM default.
        cp_kwargs["vmem_limit_bytes"] = min(int(vmem_est * 1.5),
                                            56 * 1024 * 1024)

    outp = pl.pallas_call(
        discriminator_kernel,
        out_shape=jax.ShapeDtypeStruct((Bp, out_dim), jnp.float32),
        grid_spec=pltpu.PrefetchScalarGridSpec(
            num_scalar_prefetch=0,
            grid=grid,
            in_specs=in_specs,
            out_specs=out_spec,
        ),
        compiler_params=pltpu.CompilerParams(**cp_kwargs),
        cost_estimate=pl.CostEstimate(
            flops=flops, transcendentals=0, bytes_accessed=bytes_accessed),
    )(xp, w1p, b1p, w2p, b2p, w3p, b3p, w4p, b4p)

    # Slice away batch padding only (output columns are already exact).
    return outp[:B]


def init_params(key, input_size, hidden_dim, output_size):
    """Deterministic synthetic parameters. Weights stored as (in, out),
    biases as (1, out), mimicking PyTorch Linear's uniform(-1/sqrt(in), 1/sqrt(in))."""
    dims = [input_size, hidden_dim * 4, hidden_dim * 2, hidden_dim, output_size]
    params = []
    keys = jax.random.split(key, 2 * (len(dims) - 1))
    for li in range(len(dims) - 1):
        fan_in, fan_out = dims[li], dims[li + 1]
        bound = 1.0 / (fan_in ** 0.5)
        w = jax.random.uniform(keys[2 * li], (fan_in, fan_out),
                               jnp.float32, -bound, bound)
        b = jax.random.uniform(keys[2 * li + 1], (1, fan_out),
                               jnp.float32, -bound, bound)
        params += [w, b]
    return tuple(params)


def reference_forward(x, params):
    """Pure-JAX reference mirroring the kernel's numerics (bf16 matmul inputs,
    f32 accumulation / elementwise), matching the PyTorch module in eval mode."""
    B = x.shape[0]
    h = x.reshape(B, 28 * 28).astype(jnp.float32)
    w1, b1, w2, b2, w3, b3, w4, b4 = params
    lrelu = lambda v: jnp.where(v > 0, v, 0.2 * v)

    def mm(a, w):
        return jnp.dot(a.astype(jnp.bfloat16), w.astype(jnp.bfloat16),
                       preferred_element_type=jnp.float32)

    h = lrelu(mm(h, w1) + b1)
    h = lrelu(mm(h, w2) + b2)
    h = lrelu(mm(h, w3) + b3)
    return mm(h, w4) + b4


if __name__ == "__main__":
    key = jax.random.PRNGKey(0)
    k_x, k_p = jax.random.split(key)

    B = 2
    input_size = 28 * 28      # fixed by x.view(-1, 28*28)
    hidden_dim = 32
    output_size = 1

    x = jax.random.normal(k_x, (B, 1, 28, 28), jnp.float32)
    params = init_params(k_p, input_size, hidden_dim, output_size)

    out = discriminator_forward(x, params)
    out = jax.block_until_ready(out)

    ref = reference_forward(x, params)
    assert out.shape == (B, output_size)
    assert jnp.allclose(out, ref, atol=1e-3, rtol=1e-3), "mismatch vs reference"

    print("KERNEL_OK")
</pallas_src>

<mosaic_0001>
module attributes {stable_mosaic.version = 11 : i64} {
  func.func @discriminator_kernel(%arg0: i32, %arg1: memref<16x784xf32, #tpu.memory_space<vmem>>, %arg2: memref<784x128xbf16, #tpu.memory_space<vmem>>, %arg3: memref<1x128xf32, #tpu.memory_space<vmem>>, %arg4: memref<128x128xbf16, #tpu.memory_space<vmem>>, %arg5: memref<1x128xf32, #tpu.memory_space<vmem>>, %arg6: memref<128x128xbf16, #tpu.memory_space<vmem>>, %arg7: memref<1x128xf32, #tpu.memory_space<vmem>>, %arg8: memref<128x128xbf16, #tpu.memory_space<vmem>>, %arg9: memref<1x1xf32, #tpu.memory_space<vmem>>, %arg10: memref<16x1xf32, #tpu.memory_space<vmem>>) attributes {dimension_semantics = [#tpu.dimension_semantics<parallel>], iteration_bounds = array<i64: 1>, scalar_prefetch = 0 : i64, scratch_operands = 0 : i64, tpu.core_type = #tpu.core_type<tc>, window_params = [{transform_indices = @transform_0, window_bounds = array<i64: 16, 784>}, {pipeline_mode = #tpu.pipeline_mode<synchronous>, transform_indices = @transform_1, window_bounds = array<i64: 784, 128>}, {pipeline_mode = #tpu.pipeline_mode<synchronous>, transform_indices = @transform_2, window_bounds = array<i64: 1, 128>}, {pipeline_mode = #tpu.pipeline_mode<synchronous>, transform_indices = @transform_3, window_bounds = array<i64: 128, 128>}, {pipeline_mode = #tpu.pipeline_mode<synchronous>, transform_indices = @transform_4, window_bounds = array<i64: 1, 128>}, {pipeline_mode = #tpu.pipeline_mode<synchronous>, transform_indices = @transform_5, window_bounds = array<i64: 128, 128>}, {pipeline_mode = #tpu.pipeline_mode<synchronous>, transform_indices = @transform_6, window_bounds = array<i64: 1, 128>}, {pipeline_mode = #tpu.pipeline_mode<synchronous>, transform_indices = @transform_7, window_bounds = array<i64: 128, 128>}, {pipeline_mode = #tpu.pipeline_mode<synchronous>, transform_indices = @transform_8, window_bounds = array<i64: 1, 1>}, {transform_indices = @transform_9, window_bounds = array<i64: 16, 1>}]} {
    %c0 = arith.constant 0 : index
    %c0_0 = arith.constant 0 : index
    %0 = vector.load %arg1[%c0, %c0_0] : memref<16x784xf32, #tpu.memory_space<vmem>>, vector<16x784xf32>
    %1 = arith.truncf %0 : vector<16x784xf32> to vector<16x784xbf16>
    %c0_1 = arith.constant 0 : index
    %c0_2 = arith.constant 0 : index
    %2 = vector.load %arg2[%c0_1, %c0_2] : memref<784x128xbf16, #tpu.memory_space<vmem>>, vector<784x128xbf16>
    %cst = arith.constant dense<0.000000e+00> : vector<16x128xf32>
    %3 = tpu.matmul %1, %2, %cst {dimension_numbers = #tpu.dot_dimension_numbers<[1], [0], [0], [1], [0, 0, 1, 1], [], []>} : vector<16x784xbf16>, vector<784x128xbf16>, vector<16x128xf32> -> vector<16x128xf32>
    %c0_3 = arith.constant 0 : index
    %c0_4 = arith.constant 0 : index
    %4 = vector.load %arg3[%c0_3, %c0_4] : memref<1x128xf32, #tpu.memory_space<vmem>>, vector<1x128xf32>
    %5 = vector.broadcast %4 : vector<1x128xf32> to vector<16x128xf32>
    %6 = arith.addf %3, %5 : vector<16x128xf32>
    %cst_5 = arith.constant 0.000000e+00 : f32
    %7 = vector.broadcast %cst_5 : f32 to vector<16x128xf32>
    %8 = arith.cmpf ogt, %6, %7 : vector<16x128xf32>
    %cst_6 = arith.constant 2.000000e-01 : f32
    %9 = vector.broadcast %cst_6 : f32 to vector<16x128xf32>
    %10 = arith.mulf %9, %6 : vector<16x128xf32>
    %11 = arith.select %8, %6, %10 : vector<16x128xi1>, vector<16x128xf32>
    %12 = arith.truncf %11 : vector<16x128xf32> to vector<16x128xbf16>
    %c0_7 = arith.constant 0 : index
    %c0_8 = arith.constant 0 : index
    %13 = vector.load %arg4[%c0_7, %c0_8] : memref<128x128xbf16, #tpu.memory_space<vmem>>, vector<128x128xbf16>
    %cst_9 = arith.constant dense<0.000000e+00> : vector<16x128xf32>
    %14 = tpu.matmul %12, %13, %cst_9 {dimension_numbers = #tpu.dot_dimension_numbers<[1], [0], [0], [1], [0, 0, 1, 1], [], []>} : vector<16x128xbf16>, vector<128x128xbf16>, vector<16x128xf32> -> vector<16x128xf32>
    %c0_10 = arith.constant 0 : index
    %c0_11 = arith.constant 0 : index
    %15 = vector.load %arg5[%c0_10, %c0_11] : memref<1x128xf32, #tpu.memory_space<vmem>>, vector<1x128xf32>
    %16 = vector.broadcast %15 : vector<1x128xf32> to vector<16x128xf32>
    %17 = arith.addf %14, %16 : vector<16x128xf32>
    %cst_12 = arith.constant 0.000000e+00 : f32
    %18 = vector.broadcast %cst_12 : f32 to vector<16x128xf32>
    %19 = arith.cmpf ogt, %17, %18 : vector<16x128xf32>
    %cst_13 = arith.constant 2.000000e-01 : f32
    %20 = vector.broadcast %cst_13 : f32 to vector<16x128xf32>
    %21 = arith.mulf %20, %17 : vector<16x128xf32>
    %22 = arith.select %19, %17, %21 : vector<16x128xi1>, vector<16x128xf32>
    %23 = arith.truncf %22 : vector<16x128xf32> to vector<16x128xbf16>
    %c0_14 = arith.constant 0 : index
    %c0_15 = arith.constant 0 : index
    %24 = vector.load %arg6[%c0_14, %c0_15] : memref<128x128xbf16, #tpu.memory_space<vmem>>, vector<128x128xbf16>
    %cst_16 = arith.constant dense<0.000000e+00> : vector<16x128xf32>
    %25 = tpu.matmul %23, %24, %cst_16 {dimension_numbers = #tpu.dot_dimension_numbers<[1], [0], [0], [1], [0, 0, 1, 1], [], []>} : vector<16x128xbf16>, vector<128x128xbf16>, vector<16x128xf32> -> vector<16x128xf32>
    %c0_17 = arith.constant 0 : index
    %c0_18 = arith.constant 0 : index
    %26 = vector.load %arg7[%c0_17, %c0_18] : memref<1x128xf32, #tpu.memory_space<vmem>>, vector<1x128xf32>
    %27 = vector.broadcast %26 : vector<1x128xf32> to vector<16x128xf32>
    %28 = arith.addf %25, %27 : vector<16x128xf32>
    %cst_19 = arith.constant 0.000000e+00 : f32
    %29 = vector.broadcast %cst_19 : f32 to vector<16x128xf32>
    %30 = arith.cmpf ogt, %28, %29 : vector<16x128xf32>
    %cst_20 = arith.constant 2.000000e-01 : f32
    %31 = vector.broadcast %cst_20 : f32 to vector<16x128xf32>
    %32 = arith.mulf %31, %28 : vector<16x128xf32>
    %33 = arith.select %30, %28, %32 : vector<16x128xi1>, vector<16x128xf32>
    %34 = arith.truncf %33 : vector<16x128xf32> to vector<16x128xbf16>
    %c0_21 = arith.constant 0 : index
    %c0_22 = arith.constant 0 : index
    %35 = vector.load %arg8[%c0_21, %c0_22] : memref<128x128xbf16, #tpu.memory_space<vmem>>, vector<128x128xbf16>
    %cst_23 = arith.constant dense<0.000000e+00> : vector<16x128xf32>
    %36 = tpu.matmul %34, %35, %cst_23 {dimension_numbers = #tpu.dot_dimension_numbers<[1], [0], [0], [1], [0, 0, 1, 1], [], []>} : vector<16x128xbf16>, vector<128x128xbf16>, vector<16x128xf32> -> vector<16x128xf32>
    %37 = vector.extract_strided_slice %36 {offsets = [0, 0], sizes = [16, 1], strides = [1, 1]} : vector<16x128xf32> to vector<16x1xf32>
    %c0_24 = arith.constant 0 : index
    %c0_25 = arith.constant 0 : index
    %38 = vector.load %arg9[%c0_24, %c0_25] : memref<1x1xf32, #tpu.memory_space<vmem>>, vector<1x1xf32>
    %39 = vector.broadcast %38 : vector<1x1xf32> to vector<16x1xf32>
    %40 = arith.addf %37, %39 : vector<16x1xf32>
    %c0_26 = arith.constant 0 : index
    %c0_27 = arith.constant 0 : index
    %41 = vector.load %arg10[%c0_26, %c0_27] : memref<16x1xf32, #tpu.memory_space<vmem>>, vector<16x1xf32>
    tpu.vector_store %arg10[%c0_26, %c0_27], %40 {strides = array<i32>} : memref<16x1xf32, #tpu.memory_space<vmem>>, vector<16x1xf32>,
    return
  }
  func.func @transform_0(%arg0: i32) -> (i32, i32) {
    %c0_i32 = arith.constant 0 : i32
    %c0_i32_0 = arith.constant 0 : i32
    return %arg0, %c0_i32 : i32, i32
  }
  func.func @transform_1(%arg0: i32) -> (i32, i32) {
    %c0_i32 = arith.constant 0 : i32
    %c0_i32_0 = arith.constant 0 : i32
    %c0_i32_1 = arith.constant 0 : i32
    return %c0_i32, %c0_i32_0 : i32, i32
  }
  func.func @transform_2(%arg0: i32) -> (i32, i32) {
    %c0_i32 = arith.constant 0 : i32
    %c0_i32_0 = arith.constant 0 : i32
    %c0_i32_1 = arith.constant 0 : i32
    return %c0_i32, %c0_i32_0 : i32, i32
  }
  func.func @transform_3(%arg0: i32) -> (i32, i32) {
    %c0_i32 = arith.constant 0 : i32
    %c0_i32_0 = arith.constant 0 : i32
    %c0_i32_1 = arith.constant 0 : i32
    return %c0_i32, %c0_i32_0 : i32, i32
  }
  func.func @transform_4(%arg0: i32) -> (i32, i32) {
    %c0_i32 = arith.constant 0 : i32
    %c0_i32_0 = arith.constant 0 : i32
    %c0_i32_1 = arith.constant 0 : i32
    return %c0_i32, %c0_i32_0 : i32, i32
  }
  func.func @transform_5(%arg0: i32) -> (i32, i32) {
    %c0_i32 = arith.constant 0 : i32
    %c0_i32_0 = arith.constant 0 : i32
    %c0_i32_1 = arith.constant 0 : i32
    return %c0_i32, %c0_i32_0 : i32, i32
  }
  func.func @transform_6(%arg0: i32) -> (i32, i32) {
    %c0_i32 = arith.constant 0 : i32
    %c0_i32_0 = arith.constant 0 : i32
    %c0_i32_1 = arith.constant 0 : i32
    return %c0_i32, %c0_i32_0 : i32, i32
  }
  func.func @transform_7(%arg0: i32) -> (i32, i32) {
    %c0_i32 = arith.constant 0 : i32
    %c0_i32_0 = arith.constant 0 : i32
    %c0_i32_1 = arith.constant 0 : i32
    return %c0_i32, %c0_i32_0 : i32, i32
  }
  func.func @transform_8(%arg0: i32) -> (i32, i32) {
    %c0_i32 = arith.constant 0 : i32
    %c0_i32_0 = arith.constant 0 : i32
    %c0_i32_1 = arith.constant 0 : i32
    return %c0_i32, %c0_i32_0 : i32, i32
  }
  func.func @transform_9(%arg0: i32) -> (i32, i32) {
    %c0_i32 = arith.constant 0 : i32
    %c0_i32_0 = arith.constant 0 : i32
    return %arg0, %c0_i32 : i32, i32
  }
}

</mosaic_0001>

<llo_original>
// kernel: tpu_custom_call.1
$region0: #{tpu_custom_call.1}
  #allocation0 [shape = 'u32[]', space=smem, size = 0x4, offset = 0x4, fixed_abs, tag = 'smem constant byte address 0x4 - core index']
  #allocation1 [shape = 'u32[72,128]{1,0:T(1,128)}', space=vmem, size = 0x9000, scoped, tag = 'internal scratch']
  #allocation2 [shape = 'f32[1,1]{1,0:T(1,128)S(1)}', space=vmem, size = 0x200, scoped, tag = 'scoped memory for tpu_custom_call.1']
  %s0 = inlined_call_operand.hbm [shape: f32[16,784], index: 0, kind: input, shape index: {}]
  %s1 = inlined_call_operand.hbm [shape: bf16[784,128], index: 1, kind: input, shape index: {}]
  %s2 = inlined_call_operand.vmem [shape: f32[1,128], index: 2, kind: input, shape index: {}]
  %s3 = inlined_call_operand.hbm [shape: bf16[128,128], index: 3, kind: input, shape index: {}]
  %s4 = inlined_call_operand.vmem [shape: f32[1,128], index: 4, kind: input, shape index: {}]
  %s5 = inlined_call_operand.hbm [shape: bf16[128,128], index: 5, kind: input, shape index: {}]
  %s6 = inlined_call_operand.vmem [shape: f32[1,128], index: 6, kind: input, shape index: {}]
  %s7 = inlined_call_operand.hbm [shape: bf16[128,128], index: 7, kind: input, shape index: {}]
  %s8 = inlined_call_operand.<no memory space> [shape: f32[1,1], index: 8, kind: input, shape index: {}]
  %s9 = inlined_call_operand.vmem [shape: f32[16,1], index: 9, kind: output, shape index: {}]
  %s10 = sld [smem:[#allocation0]]
  $region66: #{tpu_custom_call.1} parent=0
    _
  %s12 = ssub.s32 1, %s10
  %s13 = scalar_select 0, %s12, %s10
  %v14 = vstv %s8
  %15 = vst [vmem:[#allocation2] sm:$0x1] %v14
  $region1: #{tpu_custom_call.1} parent=0
    #allocation3 [shape = 'u8[57344]{0}', space=vmem, size = 0xe000, scoped, tag = 'input window, operand 0, single buffered']
    #allocation4 [shape = 's32[1]{0}', space=sflag, size = 0x4, scoped, tag = 'scoped memory for tpu_custom_call.1']
    #allocation5 [shape = 'u8[200704]{0}', space=vmem, size = 0x31000, scoped, tag = 'input window, operand 1, single buffered']
    #allocation6 [shape = 's32[1]{0}', space=sflag, size = 0x4, scoped, tag = 'scoped memory for tpu_custom_call.1']
    #allocation7 [shape = 'u8[32768]{0}', space=vmem, size = 0x8000, scoped, tag = 'input window, operand 3, single buffered']
    #allocation8 [shape = 'u8[32768]{0}', space=vmem, size = 0x8000, scoped, tag = 'input window, operand 5, single buffered']
    #allocation9 [shape = 's32[1]{0}', space=sflag, size = 0x4, scoped, tag = 'scoped memory for tpu_custom_call.1']
    #allocation10 [shape = 'u8[32768]{0}', space=vmem, size = 0x8000, scoped, tag = 'input window, operand 7, single buffered']
    %16 = vsyncpa [#allocation4], 0
    %17 = vsyncpa [#allocation6], 0
    %18 = vsyncpa [#allocation9], 0
    // Predicated region
    $region2: #{tpu_custom_call.1} parent=1 // pred_check
      _
    $region3: #{tpu_custom_call.1} parent=1 // pred_check_branch
      %20 = sbr.rel (0) target = $region5
    $region4: #{tpu_custom_call.1} parent=1 // pred_region
      %22 = vsyncadd [#allocation4], 0
      %s23 = sshll.u32 %s0, 4
      %s24 = int_to_ptr.hbm [resolvable:$true] %s23
      %s25 = sshll.u32 [#allocation3], 4
      %s26 = int_to_ptr.vmem [resolvable:$true] %s25
      %31 = dma.hbm_to_vmem [thread:$0]  %s24, 1792, %s26, [#allocation4], 896, 896, 56
    $region5: #{tpu_custom_call.1} parent=1 // pred_fallthru
      _
    // Predicated region
    $region6: #{tpu_custom_call.1} parent=1 // pred_check
      _
    $region7: #{tpu_custom_call.1} parent=1 // pred_check_branch
      %33 = sbr.rel (0) target = $region9
    $region8: #{tpu_custom_call.1} parent=1 // pred_region
      %35 = vsyncadd [#allocation6], 0
      %s36 = sshll.u32 %s1, 4
      %s37 = int_to_ptr.hbm [resolvable:$true] %s36
      %s38 = sshll.u32 [#allocation5], 4
      %s39 = int_to_ptr.vmem [resolvable:$true] %s38
      %44 = dma.hbm_to_vmem [thread:$0]  %s37, 6272, %s39, [#allocation6], 64, 64, 4
    $region9: #{tpu_custom_call.1} parent=1 // pred_fallthru
      _
    // Predicated region
    $region10: #{tpu_custom_call.1} parent=1 // pred_check
      _
    $region11: #{tpu_custom_call.1} parent=1 // pred_check_branch
      %46 = sbr.rel (0) target = $region13
    $region12: #{tpu_custom_call.1} parent=1 // pred_region
      _
    $region13: #{tpu_custom_call.1} parent=1 // pred_fallthru
      _
    // Predicated region
    $region14: #{tpu_custom_call.1} parent=1 // pred_check
      _
    $region15: #{tpu_custom_call.1} parent=1 // pred_check_branch
      %48 = sbr.rel (0) target = $region17
    $region16: #{tpu_custom_call.1} parent=1 // pred_region
      %50 = vsyncadd [#allocation6], 0
      %s51 = sshll.u32 %s3, 4
      %s52 = int_to_ptr.hbm [resolvable:$true] %s51
      %s53 = sshll.u32 [#allocation7], 4
      %s54 = int_to_ptr.vmem [resolvable:$true] %s53
      %59 = dma.hbm_to_vmem [thread:$0]  %s52, 1024, %s54, [#allocation6], 64, 64, 4
    $region17: #{tpu_custom_call.1} parent=1 // pred_fallthru
      _
    // Predicated region
    $region18: #{tpu_custom_call.1} parent=1 // pred_check
      _
    $region19: #{tpu_custom_call.1} parent=1 // pred_check_branch
      %61 = sbr.rel (0) target = $region21
    $region20: #{tpu_custom_call.1} parent=1 // pred_region
      _
    $region21: #{tpu_custom_call.1} parent=1 // pred_fallthru
      _
    // Predicated region
    $region22: #{tpu_custom_call.1} parent=1 // pred_check
      _
    $region23: #{tpu_custom_call.1} parent=1 // pred_check_branch
      %63 = sbr.rel (0) target = $region25
    $region24: #{tpu_custom_call.1} parent=1 // pred_region
      %65 = vsyncadd [#allocation9], 0
      %s66 = sshll.u32 %s5, 4
      %s67 = int_to_ptr.hbm [resolvable:$true] %s66
      %s68 = sshll.u32 [#allocation8], 4
      %s69 = int_to_ptr.vmem [resolvable:$true] %s68
      %74 = dma.hbm_to_vmem [thread:$0]  %s67, 1024, %s69, [#allocation9], 64, 64, 4
    $region25: #{tpu_custom_call.1} parent=1 // pred_fallthru
      _
    // Predicated region
    $region26: #{tpu_custom_call.1} parent=1 // pred_check
      _
    $region27: #{tpu_custom_call.1} parent=1 // pred_check_branch
      %76 = sbr.rel (0) target = $region29
    $region28: #{tpu_custom_call.1} parent=1 // pred_region
      _
    $region29: #{tpu_custom_call.1} parent=1 // pred_fallthru
      _
    // Predicated region
    $region30: #{tpu_custom_call.1} parent=1 // pred_check
      _
    $region31: #{tpu_custom_call.1} parent=1 // pred_check_branch
      %78 = sbr.rel (0) target = $region33
    $region32: #{tpu_custom_call.1} parent=1 // pred_region
      %80 = vsyncadd [#allocation9], 0
      %s81 = sshll.u32 %s7, 4
      %s82 = int_to_ptr.hbm [resolvable:$true] %s81
      %s83 = sshll.u32 [#allocation10], 4
      %s84 = int_to_ptr.vmem [resolvable:$true] %s83
      %89 = dma.hbm_to_vmem [thread:$0]  %s82, 1024, %s84, [#allocation9], 64, 64, 4
    $region33: #{tpu_custom_call.1} parent=1 // pred_fallthru
      _
    // Predicated region
    $region34: #{tpu_custom_call.1} parent=1 // pred_check
      _
    $region35: #{tpu_custom_call.1} parent=1 // pred_check_branch
      %91 = sbr.rel (0) target = $region37
    $region36: #{tpu_custom_call.1} parent=1 // pred_region
      _
    $region37: #{tpu_custom_call.1} parent=1 // pred_fallthru
      _
    // Predicated region
    $region38: #{tpu_custom_call.1} parent=1 // pred_check
      _
    $region39: #{tpu_custom_call.1} parent=1 // pred_check_branch
      %93 = sbr.rel (0) target = $region41
    $region40: #{tpu_custom_call.1} parent=1 // pred_region
      %95 = dma.done [#allocation4], 1792
    $region41: #{tpu_custom_call.1} parent=1 // pred_fallthru
      _
    // Predicated region
    $region42: #{tpu_custom_call.1} parent=1 // pred_check
      _
    $region43: #{tpu_custom_call.1} parent=1 // pred_check_branch
      %97 = sbr.rel (0) target = $region45
    $region44: #{tpu_custom_call.1} parent=1 // pred_region
      %99 = dma.done [#allocation6], 6272
    $region45: #{tpu_custom_call.1} parent=1 // pred_fallthru
      _
    // Predicated region
    $region46: #{tpu_custom_call.1} parent=1 // pred_check
      _
    $region47: #{tpu_custom_call.1} parent=1 // pred_check_branch
      %101 = sbr.rel (0) target = $region49
    $region48: #{tpu_custom_call.1} parent=1 // pred_region
      %103 = dma.done [#allocation6], 1024
    $region49: #{tpu_custom_call.1} parent=1 // pred_fallthru
      _
    // Predicated region
    $region50: #{tpu_custom_call.1} parent=1 // pred_check
      _
    $region51: #{tpu_custom_call.1} parent=1 // pred_check_branch
      %105 = sbr.rel (0) target = $region53
    $region52: #{tpu_custom_call.1} parent=1 // pred_region
      %107 = dma.done [#allocation9], 1024
    $region53: #{tpu_custom_call.1} parent=1 // pred_fallthru
      _
    // Predicated region
    $region54: #{tpu_custom_call.1} parent=1 // pred_check
      _
    $region55: #{tpu_custom_call.1} parent=1 // pred_check_branch
      %109 = sbr.rel (0) target = $region57
    $region56: #{tpu_custom_call.1} parent=1 // pred_region
      %111 = dma.done [#allocation9], 1024
    $region57: #{tpu_custom_call.1} parent=1 // pred_fallthru
      _
    %v113 = vld [vmem:[#allocation3] sm:$0xff]
    %v114 = vld [vmem:[#allocation3 + $0x8] sm:$0xff]
    %v115 = vld [vmem:[#allocation3 + $0x10] sm:$0xff]
    %v116 = vld [vmem:[#allocation3 + $0x18] sm:$0xff]
    %v117 = vld [vmem:[#allocation3 + $0x20] sm:$0xff]
    %v118 = vld [vmem:[#allocation3 + $0x28] sm:$0xff]
    %v119 = vld [vmem:[#allocation3 + $0x30] sm:$0xff]
    %v120 = vld [vmem:[#allocation3 + $0x38] sm:$0xff]
    %v121 = vld [vmem:[#allocation3 + $0x40] sm:$0xff]
    %v122 = vld [vmem:[#allocation3 + $0x48] sm:$0xff]
    %v123 = vld [vmem:[#allocation3 + $0x50] sm:$0xff]
    %v124 = vld [vmem:[#allocation3 + $0x58] sm:$0xff]
    %v125 = vld [vmem:[#allocation3 + $0x60] sm:$0xff]
    %v126 = vld [vmem:[#allocation3 + $0x68] sm:$0xff]
    %v127 = vpack.c.bf16 %v120, %v113
    %v128 = vpack.c.bf16 %v121, %v114
    %v129 = vpack.c.bf16 %v122, %v115
    %v130 = vpack.c.bf16 %v123, %v116
    %v131 = vpack.c.bf16 %v124, %v117
    %v132 = vpack.c.bf16 %v125, %v118
    %v133 = vpack.c.bf16 %v126, %v119
    %v134 = vld [vmem:[#allocation5] sm:$0xf]
    %v135 = vld [vmem:[#allocation5 + $0x4] sm:$0xf]
    %v136 = vld [vmem:[#allocation5 + $0x8] sm:$0xf]
    %v137 = vld [vmem:[#allocation5 + $0xc] sm:$0xf]
    %v138 = vld [vmem:[#allocation5 + $0x10] sm:$0xf]
    %v139 = vld [vmem:[#allocation5 + $0x14] sm:$0xf]
    %v140 = vld [vmem:[#allocation5 + $0x18] sm:$0xf]
    %v141 = vld [vmem:[#allocation5 + $0x1c] sm:$0xf]
    %v142 = vld [vmem:[#allocation5 + $0x20] sm:$0xf]
    %v143 = vld [vmem:[#allocation5 + $0x24] sm:$0xf]
    %v144 = vld [vmem:[#allocation5 + $0x28] sm:$0xf]
    %v145 = vld [vmem:[#allocation5 + $0x2c] sm:$0xf]
    %v146 = vld [vmem:[#allocation5 + $0x30] sm:$0xf]
    %v147 = vld [vmem:[#allocation5 + $0x34] sm:$0xf]
    %v148 = vld [vmem:[#allocation5 + $0x38] sm:$0xf]
    %v149 = vld [vmem:[#allocation5 + $0x3c] sm:$0xf]
    %v150 = vld [vmem:[#allocation5 + $0x40] sm:$0xf]
    %v151 = vld [vmem:[#allocation5 + $0x44] sm:$0xf]
    %v152 = vld [vmem:[#allocation5 + $0x48] sm:$0xf]
    %v153 = vld [vmem:[#allocation5 + $0x4c] sm:$0xf]
    %v154 = vld [vmem:[#allocation5 + $0x50] sm:$0xf]
    %v155 = vld [vmem:[#allocation5 + $0x54] sm:$0xf]
    %v156 = vld [vmem:[#allocation5 + $0x58] sm:$0xf]
    %v157 = vld [vmem:[#allocation5 + $0x5c] sm:$0xf]
    %v158 = vld [vmem:[#allocation5 + $0x60] sm:$0xf]
    %v159 = vld [vmem:[#allocation5 + $0x64] sm:$0xf]
    %v160 = vld [vmem:[#allocation5 + $0x68] sm:$0xf]
    %v161 = vld [vmem:[#allocation5 + $0x6c] sm:$0xf]
    %v162 = vld [vmem:[#allocation5 + $0x70] sm:$0xf]
    %v163 = vld [vmem:[#allocation5 + $0x74] sm:$0xf]
    %v164 = vld [vmem:[#allocation5 + $0x78] sm:$0xf]
    %v165 = vld [vmem:[#allocation5 + $0x7c] sm:$0xf]
    %v166 = vld [vmem:[#allocation5 + $0x80] sm:$0xf]
    %v167 = vld [vmem:[#allocation5 + $0x84] sm:$0xf]
    %v168 = vld [vmem:[#allocation5 + $0x88] sm:$0xf]
    %v169 = vld [vmem:[#allocation5 + $0x8c] sm:$0xf]
    %v170 = vld [vmem:[#allocation5 + $0x90] sm:$0xf]
    %v171 = vld [vmem:[#allocation5 + $0x94] sm:$0xf]
    %v172 = vld [vmem:[#allocation5 + $0x98] sm:$0xf]
    %v173 = vld [vmem:[#allocation5 + $0x9c] sm:$0xf]
    %v174 = vld [vmem:[#allocation5 + $0xa0] sm:$0xf]
    %v175 = vld [vmem:[#allocation5 + $0xa4] sm:$0xf]
    %v176 = vld [vmem:[#allocation5 + $0xa8] sm:$0xf]
    %v177 = vld [vmem:[#allocation5 + $0xac] sm:$0xf]
    %v178 = vld [vmem:[#allocation5 + $0xb0] sm:$0xf]
    %v179 = vld [vmem:[#allocation5 + $0xb4] sm:$0xf]
    %v180 = vld [vmem:[#allocation5 + $0xb8] sm:$0xf]
    %v181 = vld [vmem:[#allocation5 + $0xbc] sm:$0xf]
    %v182 = vld [vmem:[#allocation5 + $0xc0] sm:$0xf]
    %v183 = vld [vmem:[#allocation5 + $0xc4] sm:$0xf]
    %v184 = vld [vmem:[#allocation5 + $0xc8] sm:$0xf]
    %v185 = vld [vmem:[#allocation5 + $0xcc] sm:$0xf]
    %v186 = vld [vmem:[#allocation5 + $0xd0] sm:$0xf]
    %v187 = vld [vmem:[#allocation5 + $0xd4] sm:$0xf]
    %v188 = vld [vmem:[#allocation5 + $0xd8] sm:$0xf]
    %v189 = vld [vmem:[#allocation5 + $0xdc] sm:$0xf]
    %v190 = vld [vmem:[#allocation5 + $0xe0] sm:$0xf]
    %v191 = vld [vmem:[#allocation5 + $0xe4] sm:$0xf]
    %v192 = vld [vmem:[#allocation5 + $0xe8] sm:$0xf]
    %v193 = vld [vmem:[#allocation5 + $0xec] sm:$0xf]
    %v194 = vld [vmem:[#allocation5 + $0xf0] sm:$0xf]
    %v195 = vld [vmem:[#allocation5 + $0xf4] sm:$0xf]
    %v196 = vld [vmem:[#allocation5 + $0xf8] sm:$0xf]
    %v197 = vld [vmem:[#allocation5 + $0xfc] sm:$0xf]
    %v198 = vld [vmem:[#allocation5 + $0x100] sm:$0xf]
    %v199 = vld [vmem:[#allocation5 + $0x104] sm:$0xf]
    %v200 = vld [vmem:[#allocation5 + $0x108] sm:$0xf]
    %v201 = vld [vmem:[#allocation5 + $0x10c] sm:$0xf]
    %v202 = vld [vmem:[#allocation5 + $0x110] sm:$0xf]
    %v203 = vld [vmem:[#allocation5 + $0x114] sm:$0xf]
    %v204 = vld [vmem:[#allocation5 + $0x118] sm:$0xf]
    %v205 = vld [vmem:[#allocation5 + $0x11c] sm:$0xf]
    %v206 = vld [vmem:[#allocation5 + $0x120] sm:$0xf]
    %v207 = vld [vmem:[#allocation5 + $0x124] sm:$0xf]
    %v208 = vld [vmem:[#allocation5 + $0x128] sm:$0xf]
    %v209 = vld [vmem:[#allocation5 + $0x12c] sm:$0xf]
    %v210 = vld [vmem:[#allocation5 + $0x130] sm:$0xf]
    %v211 = vld [vmem:[#allocation5 + $0x134] sm:$0xf]
    %v212 = vld [vmem:[#allocation5 + $0x138] sm:$0xf]
    %v213 = vld [vmem:[#allocation5 + $0x13c] sm:$0xf]
    %v214 = vld [vmem:[#allocation5 + $0x140] sm:$0xf]
    %v215 = vld [vmem:[#allocation5 + $0x144] sm:$0xf]
    %v216 = vld [vmem:[#allocation5 + $0x148] sm:$0xf]
    %v217 = vld [vmem:[#allocation5 + $0x14c] sm:$0xf]
    %v218 = vld [vmem:[#allocation5 + $0x150] sm:$0xf]
    %v219 = vld [vmem:[#allocation5 + $0x154] sm:$0xf]
    %v220 = vld [vmem:[#allocation5 + $0x158] sm:$0xf]
    %v221 = vld [vmem:[#allocation5 + $0x15c] sm:$0xf]
    %v222 = vld [vmem:[#allocation5 + $0x160] sm:$0xf]
    %v223 = vld [vmem:[#allocation5 + $0x164] sm:$0xf]
    %v224 = vld [vmem:[#allocation5 + $0x168] sm:$0xf]
    %v225 = vld [vmem:[#allocation5 + $0x16c] sm:$0xf]
    %v226 = vld [vmem:[#allocation5 + $0x170] sm:$0xf]
    %v227 = vld [vmem:[#allocation5 + $0x174] sm:$0xf]
    %v228 = vld [vmem:[#allocation5 + $0x178] sm:$0xf]
    %v229 = vld [vmem:[#allocation5 + $0x17c] sm:$0xf]
    %v230 = vld [vmem:[#allocation5 + $0x180] sm:$0xf]
    %v231 = vld [vmem:[#allocation5 + $0x184] sm:$0xf]
    %v232 = vld [vmem:[%s2] sm:$0x1]
    %v234 = vperm.slane %v232, 0
    %v334 = vunpack.c.l.b16 %v134
    %v335 = vunpack.c.l.b16 %v135
    %v336 = vunpack.c.l.b16 %v136
    %v337 = vunpack.c.l.b16 %v137
    %v338 = vunpack.c.l.b16 %v138
    %v339 = vunpack.c.l.b16 %v139
    %v340 = vunpack.c.l.b16 %v140
    %v341 = vunpack.c.l.b16 %v141
    %v342 = vunpack.c.l.b16 %v142
    %v343 = vunpack.c.l.b16 %v143
    %v344 = vunpack.c.l.b16 %v144
    %v345 = vunpack.c.l.b16 %v145
    %v346 = vunpack.c.l.b16 %v146
    %v347 = vunpack.c.l.b16 %v147
    %v348 = vunpack.c.l.b16 %v148
    %v349 = vunpack.c.l.b16 %v149
    %v350 = vunpack.c.l.b16 %v150
    %v351 = vunpack.c.l.b16 %v151
    %v352 = vunpack.c.l.b16 %v152
    %v353 = vunpack.c.l.b16 %v153
    %v354 = vunpack.c.l.b16 %v154
    %v355 = vunpack.c.l.b16 %v155
    %v356 = vunpack.c.l.b16 %v156
    %v357 = vunpack.c.l.b16 %v157
    %v358 = vunpack.c.l.b16 %v158
    %v359 = vunpack.c.l.b16 %v159
    %v360 = vunpack.c.l.b16 %v160
    %v361 = vunpack.c.l.b16 %v161
    %v362 = vunpack.c.l.b16 %v162
    %v363 = vunpack.c.l.b16 %v163
    %v364 = vunpack.c.l.b16 %v164
    %v365 = vunpack.c.l.b16 %v165
    %v366 = vunpack.c.l.b16 %v166
    %v367 = vunpack.c.l.b16 %v167
    %v368 = vunpack.c.l.b16 %v168
    %v369 = vunpack.c.l.b16 %v169
    %v370 = vunpack.c.l.b16 %v170
    %v371 = vunpack.c.l.b16 %v171
    %v372 = vunpack.c.l.b16 %v172
    %v373 = vunpack.c.l.b16 %v173
    %v374 = vunpack.c.l.b16 %v174
    %v375 = vunpack.c.l.b16 %v175
    %v376 = vunpack.c.l.b16 %v176
    %v377 = vunpack.c.l.b16 %v177
    %v378 = vunpack.c.l.b16 %v178
    %v379 = vunpack.c.l.b16 %v179
    %v380 = vunpack.c.l.b16 %v180
    %v381 = vunpack.c.l.b16 %v181
    %v382 = vunpack.c.l.b16 %v182
    %v383 = vunpack.c.l.b16 %v183
    %v384 = vunpack.c.l.b16 %v184
    %v385 = vunpack.c.l.b16 %v185
    %v386 = vunpack.c.l.b16 %v186
    %v387 = vunpack.c.l.b16 %v187
    %v388 = vunpack.c.l.b16 %v188
    %v389 = vunpack.c.l.b16 %v189
    %v390 = vunpack.c.l.b16 %v190
    %v391 = vunpack.c.l.b16 %v191
    %v392 = vunpack.c.l.b16 %v192
    %v393 = vunpack.c.l.b16 %v193
    %v394 = vunpack.c.l.b16 %v194
    %v395 = vunpack.c.l.b16 %v195
    %v396 = vunpack.c.l.b16 %v196
    %v397 = vunpack.c.l.b16 %v197
    %v398 = vunpack.c.l.b16 %v198
    %v399 = vunpack.c.l.b16 %v199
    %v400 = vunpack.c.l.b16 %v200
    %v401 = vunpack.c.l.b16 %v201
    %v402 = vunpack.c.l.b16 %v202
    %v403 = vunpack.c.l.b16 %v203
    %v404 = vunpack.c.l.b16 %v204
    %v405 = vunpack.c.l.b16 %v205
    %v406 = vunpack.c.l.b16 %v206
    %v407 = vunpack.c.l.b16 %v207
    %v408 = vunpack.c.l.b16 %v208
    %v409 = vunpack.c.l.b16 %v209
    %v410 = vunpack.c.l.b16 %v210
    %v411 = vunpack.c.l.b16 %v211
    %v412 = vunpack.c.l.b16 %v212
    %v413 = vunpack.c.l.b16 %v213
    %v414 = vunpack.c.l.b16 %v214
    %v415 = vunpack.c.l.b16 %v215
    %v416 = vunpack.c.l.b16 %v216
    %v417 = vunpack.c.l.b16 %v217
    %v418 = vunpack.c.l.b16 %v218
    %v419 = vunpack.c.l.b16 %v219
    %v420 = vunpack.c.l.b16 %v220
    %v421 = vunpack.c.l.b16 %v221
    %v422 = vunpack.c.l.b16 %v222
    %v423 = vunpack.c.l.b16 %v223
    %v424 = vunpack.c.l.b16 %v224
    %v425 = vunpack.c.l.b16 %v225
    %v426 = vunpack.c.l.b16 %v226
    %v427 = vunpack.c.l.b16 %v227
    %v428 = vunpack.c.l.b16 %v228
    %v429 = vunpack.c.l.b16 %v229
    %v430 = vunpack.c.l.b16 %v230
    %v431 = vunpack.c.l.b16 %v231
    %v432 = vpack.c.b16 %v335, %v334
    %v433 = vpack.c.b16 %v337, %v336
    %v434 = vpack.c.b16 %v339, %v338
    %v435 = vpack.c.b16 %v341, %v340
    %v436 = vpack.c.b16 %v343, %v342
    %v437 = vpack.c.b16 %v345, %v344
    %v438 = vpack.c.b16 %v347, %v346
    %v439 = vpack.c.b16 %v349, %v348
    %v440 = vpack.c.b16 %v351, %v350
    %v441 = vpack.c.b16 %v353, %v352
    %v442 = vpack.c.b16 %v355, %v354
    %v443 = vpack.c.b16 %v357, %v356
    %v444 = vpack.c.b16 %v359, %v358
    %v445 = vpack.c.b16 %v361, %v360
    %v446 = vpack.c.b16 %v363, %v362
    %v447 = vpack.c.b16 %v365, %v364
    %v448 = vpack.c.b16 %v367, %v366
    %v449 = vpack.c.b16 %v369, %v368
    %v450 = vpack.c.b16 %v371, %v370
    %v451 = vpack.c.b16 %v373, %v372
    %v452 = vpack.c.b16 %v375, %v374
    %v453 = vpack.c.b16 %v377, %v376
    %v454 = vpack.c.b16 %v379, %v378
    %v455 = vpack.c.b16 %v381, %v380
    %v456 = vpack.c.b16 %v383, %v382
    %v457 = vpack.c.b16 %v385, %v384
    %v458 = vpack.c.b16 %v387, %v386
    %v459 = vpack.c.b16 %v389, %v388
    %v460 = vpack.c.b16 %v391, %v390
    %v461 = vpack.c.b16 %v393, %v392
    %v462 = vpack.c.b16 %v395, %v394
    %v463 = vpack.c.b16 %v397, %v396
    %v464 = vpack.c.b16 %v399, %v398
    %v465 = vpack.c.b16 %v401, %v400
    %v466 = vpack.c.b16 %v403, %v402
    %v467 = vpack.c.b16 %v405, %v404
    %v468 = vpack.c.b16 %v407, %v406
    %v469 = vpack.c.b16 %v409, %v408
    %v470 = vpack.c.b16 %v411, %v410
    %v471 = vpack.c.b16 %v413, %v412
    %v472 = vpack.c.b16 %v415, %v414
    %v473 = vpack.c.b16 %v417, %v416
    %v474 = vpack.c.b16 %v419, %v418
    %v475 = vpack.c.b16 %v421, %v420
    %v476 = vpack.c.b16 %v423, %v422
    %v477 = vpack.c.b16 %v425, %v424
    %v478 = vpack.c.b16 %v427, %v426
    %v479 = vpack.c.b16 %v429, %v428
    %v480 = vpack.c.b16 %v431, %v430
    %vm530 = vcmask 130048
    %v532 = vsel %vm530, %v133, 0
    %534 = vmatpush.bf16.msra.mxu0 %v439
    %535 = vmatpush.bf16.msra.mxu0 %v438
    %536 = vmatpush.bf16.msra.mxu0 %v437
    %537 = vmatpush.bf16.msra.mxu0 %v436
    %538 = vmatpush.bf16.msra.mxu0 %v435
    %539 = vmatpush.bf16.msra.mxu0 %v434
    %540 = vmatpush.bf16.msra.mxu0 %v433
    %541 = vmatpush.bf16.msra.mxu0 %v432
    %542 = vmatmul.bf16.gmra.mxu0 %v127
    %v543 = vpop.f32.mrf.mxu0
    %v544 = vadd.f32 %v234, %v543
    %v545 = vpop.f32.mrf.mxu0
    %v546 = vadd.f32 %v234, %v545
    %547 = vdwg.mxu0
    %548 = vmatpush.bf16.msra.mxu0 %v447
    %549 = vmatpush.bf16.msra.mxu0 %v446
    %550 = vmatpush.bf16.msra.mxu0 %v445
    %551 = vmatpush.bf16.msra.mxu0 %v444
    %552 = vmatpush.bf16.msra.mxu0 %v443
    %553 = vmatpush.bf16.msra.mxu0 %v442
    %554 = vmatpush.bf16.msra.mxu0 %v441
    %555 = vmatpush.bf16.msra.mxu0 %v440
    %556 = vmatmul.bf16.gmra.mxu0 %v128
    %v557 = vpop.f32.mrf.mxu0
    %v558 = vadd.f32 %v544, %v557
    %v559 = vpop.f32.mrf.mxu0
    %v560 = vadd.f32 %v546, %v559
    %561 = vdwg.mxu0
    %562 = vmatpush.bf16.msra.mxu0 %v455
    %563 = vmatpush.bf16.msra.mxu0 %v454
    %564 = vmatpush.bf16.msra.mxu0 %v453
    %565 = vmatpush.bf16.msra.mxu0 %v452
    %566 = vmatpush.bf16.msra.mxu0 %v451
    %567 = vmatpush.bf16.msra.mxu0 %v450
    %568 = vmatpush.bf16.msra.mxu0 %v449
    %569 = vmatpush.bf16.msra.mxu0 %v448
    %570 = vmatmul.bf16.gmra.mxu0 %v129
    %v571 = vpop.f32.mrf.mxu0
    %v572 = vadd.f32 %v558, %v571
    %v573 = vpop.f32.mrf.mxu0
    %v574 = vadd.f32 %v560, %v573
    %575 = vdwg.mxu0
    %576 = vmatpush.bf16.msra.mxu0 %v463
    %577 = vmatpush.bf16.msra.mxu0 %v462
    %578 = vmatpush.bf16.msra.mxu0 %v461
    %579 = vmatpush.bf16.msra.mxu0 %v460
    %580 = vmatpush.bf16.msra.mxu0 %v459
    %581 = vmatpush.bf16.msra.mxu0 %v458
    %582 = vmatpush.bf16.msra.mxu0 %v457
    %583 = vmatpush.bf16.msra.mxu0 %v456
    %584 = vmatmul.bf16.gmra.mxu0 %v130
    %v585 = vpop.f32.mrf.mxu0
    %v586 = vadd.f32 %v572, %v585
    %v587 = vpop.f32.mrf.mxu0
    %v588 = vadd.f32 %v574, %v587
    %589 = vdwg.mxu0
    %590 = vmatpush.bf16.msra.mxu0 %v471
    %591 = vmatpush.bf16.msra.mxu0 %v470
    %592 = vmatpush.bf16.msra.mxu0 %v469
    %593 = vmatpush.bf16.msra.mxu0 %v468
    %594 = vmatpush.bf16.msra.mxu0 %v467
    %595 = vmatpush.bf16.msra.mxu0 %v466
    %596 = vmatpush.bf16.msra.mxu0 %v465
    %597 = vmatpush.bf16.msra.mxu0 %v464
    %598 = vmatmul.bf16.gmra.mxu0 %v131
    %v599 = vpop.f32.mrf.mxu0
    %v600 = vadd.f32 %v586, %v599
    %v601 = vpop.f32.mrf.mxu0
    %v602 = vadd.f32 %v588, %v601
    %603 = vdwg.mxu0
    %604 = vmatpush.bf16.msra.mxu0 %v479
    %605 = vmatpush.bf16.msra.mxu0 %v478
    %606 = vmatpush.bf16.msra.mxu0 %v477
    %607 = vmatpush.bf16.msra.mxu0 %v476
    %608 = vmatpush.bf16.msra.mxu0 %v475
    %609 = vmatpush.bf16.msra.mxu0 %v474
    %610 = vmatpush.bf16.msra.mxu0 %v473
    %611 = vmatpush.bf16.msra.mxu0 %v472
    %612 = vmatmul.bf16.gmra.mxu0 %v132
    %v613 = vpop.f32.mrf.mxu0
    %v614 = vadd.f32 %v600, %v613
    %v615 = vpop.f32.mrf.mxu0
    %v616 = vadd.f32 %v602, %v615
    %617 = vdwg.mxu0
    %618 = vmatpush.bf16.msra.mxu0 0
    %619 = vmatpush.bf16.msra.mxu0 0
    %620 = vmatpush.bf16.msra.mxu0 0
    %621 = vmatpush.bf16.msra.mxu0 0
    %622 = vmatpush.bf16.msra.mxu0 0
    %623 = vmatpush.bf16.msra.mxu0 0
    %624 = vmatpush.bf16.msra.mxu0 0
    %625 = vmatpush.bf16.msra.mxu0 %v480
    %626 = vmatmul.bf16.gmra.mxu0 %v532
    %v627 = vpop.f32.mrf.mxu0
    %v628 = vadd.f32 %v614, %v627
    %v629 = vpop.f32.mrf.mxu0
    %v630 = vadd.f32 %v616, %v629
    %631 = vdwg.mxu0
    %vm632 = vcmp.gt.f32.partialorder %v628, 0.0
    %vm633 = vcmp.gt.f32.partialorder %v630, 0.0
    %v634 = vmul.f32 %v628, 0.2
    %v635 = vmul.f32 %v630, 0.2
    %v636 = vsel %vm632, %v628, %v634
    %v637 = vsel %vm633, %v630, %v635
    %v638 = vpack.c.bf16 %v637, %v636
    %v639 = vld [vmem:[#allocation7] sm:$0xf]
    %v640 = vld [vmem:[#allocation7 + $0x4] sm:$0xf]
    %v641 = vld [vmem:[#allocation7 + $0x8] sm:$0xf]
    %v642 = vld [vmem:[#allocation7 + $0xc] sm:$0xf]
    %v643 = vld [vmem:[#allocation7 + $0x10] sm:$0xf]
    %v644 = vld [vmem:[#allocation7 + $0x14] sm:$0xf]
    %v645 = vld [vmem:[#allocation7 + $0x18] sm:$0xf]
    %v646 = vld [vmem:[#allocation7 + $0x1c] sm:$0xf]
    %v647 = vld [vmem:[#allocation7 + $0x20] sm:$0xf]
    %v648 = vld [vmem:[#allocation7 + $0x24] sm:$0xf]
    %v649 = vld [vmem:[#allocation7 + $0x28] sm:$0xf]
    %v650 = vld [vmem:[#allocation7 + $0x2c] sm:$0xf]
    %v651 = vld [vmem:[#allocation7 + $0x30] sm:$0xf]
    %v652 = vld [vmem:[#allocation7 + $0x34] sm:$0xf]
    %v653 = vld [vmem:[#allocation7 + $0x38] sm:$0xf]
    %v654 = vld [vmem:[#allocation7 + $0x3c] sm:$0xf]
    %v655 = vld [vmem:[%s4] sm:$0x1]
    %v657 = vperm.slane %v655, 0
    %v675 = vunpack.c.l.b16 %v639
    %v676 = vunpack.c.l.b16 %v640
    %v677 = vunpack.c.l.b16 %v641
    %v678 = vunpack.c.l.b16 %v642
    %v679 = vunpack.c.l.b16 %v643
    %v680 = vunpack.c.l.b16 %v644
    %v681 = vunpack.c.l.b16 %v645
    %v682 = vunpack.c.l.b16 %v646
    %v683 = vunpack.c.l.b16 %v647
    %v684 = vunpack.c.l.b16 %v648
    %v685 = vunpack.c.l.b16 %v649
    %v686 = vunpack.c.l.b16 %v650
    %v687 = vunpack.c.l.b16 %v651
    %v688 = vunpack.c.l.b16 %v652
    %v689 = vunpack.c.l.b16 %v653
    %v690 = vunpack.c.l.b16 %v654
    %v691 = vpack.c.b16 %v676, %v675
    %v692 = vpack.c.b16 %v678, %v677
    %v693 = vpack.c.b16 %v680, %v679
    %v694 = vpack.c.b16 %v682, %v681
    %v695 = vpack.c.b16 %v684, %v683
    %v696 = vpack.c.b16 %v686, %v685
    %v697 = vpack.c.b16 %v688, %v687
    %v698 = vpack.c.b16 %v690, %v689
    %707 = vmatpush.bf16.msra.mxu0 %v698
    %708 = vmatpush.bf16.msra.mxu0 %v697
    %709 = vmatpush.bf16.msra.mxu0 %v696
    %710 = vmatpush.bf16.msra.mxu0 %v695
    %711 = vmatpush.bf16.msra.mxu0 %v694
    %712 = vmatpush.bf16.msra.mxu0 %v693
    %713 = vmatpush.bf16.msra.mxu0 %v692
    %714 = vmatpush.bf16.msra.mxu0 %v691
    %715 = vmatmul.bf16.gmra.mxu0 %v638
    %v716 = vpop.f32.mrf.mxu0
    %v717 = vadd.f32 %v657, %v716
    %v718 = vpop.f32.mrf.mxu0
    %v719 = vadd.f32 %v657, %v718
    %720 = vdwg.mxu0
    %vm721 = vcmp.gt.f32.partialorder %v717, 0.0
    %vm722 = vcmp.gt.f32.partialorder %v719, 0.0
    %v723 = vmul.f32 %v717, 0.2
    %v724 = vmul.f32 %v719, 0.2
    %v725 = vsel %vm721, %v717, %v723
    %v726 = vsel %vm722, %v719, %v724
    %v727 = vpack.c.bf16 %v726, %v725
    %v728 = vld [vmem:[#allocation8] sm:$0xf]
    %v729 = vld [vmem:[#allocation8 + $0x4] sm:$0xf]
    %v730 = vld [vmem:[#allocation8 + $0x8] sm:$0xf]
    %v731 = vld [vmem:[#allocation8 + $0xc] sm:$0xf]
    %v732 = vld [vmem:[#allocation8 + $0x10] sm:$0xf]
    %v733 = vld [vmem:[#allocation8 + $0x14] sm:$0xf]
    %v734 = vld [vmem:[#allocation8 + $0x18] sm:$0xf]
    %v735 = vld [vmem:[#allocation8 + $0x1c] sm:$0xf]
    %v736 = vld [vmem:[#allocation8 + $0x20] sm:$0xf]
    %v737 = vld [vmem:[#allocation8 + $0x24] sm:$0xf]
    %v738 = vld [vmem:[#allocation8 + $0x28] sm:$0xf]
    %v739 = vld [vmem:[#allocation8 + $0x2c] sm:$0xf]
    %v740 = vld [vmem:[#allocation8 + $0x30] sm:$0xf]
    %v741 = vld [vmem:[#allocation8 + $0x34] sm:$0xf]
    %v742 = vld [vmem:[#allocation8 + $0x38] sm:$0xf]
    %v743 = vld [vmem:[#allocation8 + $0x3c] sm:$0xf]
    %v744 = vld [vmem:[%s6] sm:$0x1]
    %v746 = vperm.slane %v744, 0
    %v764 = vunpack.c.l.b16 %v728
    %v765 = vunpack.c.l.b16 %v729
    %v766 = vunpack.c.l.b16 %v730
    %v767 = vunpack.c.l.b16 %v731
    %v768 = vunpack.c.l.b16 %v732
    %v769 = vunpack.c.l.b16 %v733
    %v770 = vunpack.c.l.b16 %v734
    %v771 = vunpack.c.l.b16 %v735
    %v772 = vunpack.c.l.b16 %v736
    %v773 = vunpack.c.l.b16 %v737
    %v774 = vunpack.c.l.b16 %v738
    %v775 = vunpack.c.l.b16 %v739
    %v776 = vunpack.c.l.b16 %v740
    %v777 = vunpack.c.l.b16 %v741
    %v778 = vunpack.c.l.b16 %v742
    %v779 = vunpack.c.l.b16 %v743
    %v780 = vpack.c.b16 %v765, %v764
    %v781 = vpack.c.b16 %v767, %v766
    %v782 = vpack.c.b16 %v769, %v768
    %v783 = vpack.c.b16 %v771, %v770
    %v784 = vpack.c.b16 %v773, %v772
    %v785 = vpack.c.b16 %v775, %v774
    %v786 = vpack.c.b16 %v777, %v776
    %v787 = vpack.c.b16 %v779, %v778
    %796 = vmatpush.bf16.msra.mxu0 %v787
    %797 = vmatpush.bf16.msra.mxu0 %v786
    %798 = vmatpush.bf16.msra.mxu0 %v785
    %799 = vmatpush.bf16.msra.mxu0 %v784
    %800 = vmatpush.bf16.msra.mxu0 %v783
    %801 = vmatpush.bf16.msra.mxu0 %v782
    %802 = vmatpush.bf16.msra.mxu0 %v781
    %803 = vmatpush.bf16.msra.mxu0 %v780
    %804 = vmatmul.bf16.gmra.mxu0 %v727
    %v805 = vpop.f32.mrf.mxu0
    %v806 = vadd.f32 %v746, %v805
    %v807 = vpop.f32.mrf.mxu0
    %v808 = vadd.f32 %v746, %v807
    %809 = vdwg.mxu0
    %vm810 = vcmp.gt.f32.partialorder %v806, 0.0
    %vm811 = vcmp.gt.f32.partialorder %v808, 0.0
    %v812 = vmul.f32 %v806, 0.2
    %v813 = vmul.f32 %v808, 0.2
    %v814 = vsel %vm810, %v806, %v812
    %v815 = vsel %vm811, %v808, %v813
    %v816 = vpack.c.bf16 %v815, %v814
    %v817 = vld [vmem:[#allocation10] sm:$0xf]
    %v818 = vld [vmem:[#allocation10 + $0x4] sm:$0xf]
    %v819 = vld [vmem:[#allocation10 + $0x8] sm:$0xf]
    %v820 = vld [vmem:[#allocation10 + $0xc] sm:$0xf]
    %v821 = vld [vmem:[#allocation10 + $0x10] sm:$0xf]
    %v822 = vld [vmem:[#allocation10 + $0x14] sm:$0xf]
    %v823 = vld [vmem:[#allocation10 + $0x18] sm:$0xf]
    %v824 = vld [vmem:[#allocation10 + $0x1c] sm:$0xf]
    %v825 = vld [vmem:[#allocation10 + $0x20] sm:$0xf]
    %v826 = vld [vmem:[#allocation10 + $0x24] sm:$0xf]
    %v827 = vld [vmem:[#allocation10 + $0x28] sm:$0xf]
    %v828 = vld [vmem:[#allocation10 + $0x2c] sm:$0xf]
    %v829 = vld [vmem:[#allocation10 + $0x30] sm:$0xf]
    %v830 = vld [vmem:[#allocation10 + $0x34] sm:$0xf]
    %v831 = vld [vmem:[#allocation10 + $0x38] sm:$0xf]
    %v832 = vld [vmem:[#allocation10 + $0x3c] sm:$0xf]
    %v849 = vunpack.c.l.b16 %v817
    %v850 = vunpack.c.l.b16 %v818
    %v851 = vunpack.c.l.b16 %v819
    %v852 = vunpack.c.l.b16 %v820
    %v853 = vunpack.c.l.b16 %v821
    %v854 = vunpack.c.l.b16 %v822
    %v855 = vunpack.c.l.b16 %v823
    %v856 = vunpack.c.l.b16 %v824
    %v857 = vunpack.c.l.b16 %v825
    %v858 = vunpack.c.l.b16 %v826
    %v859 = vunpack.c.l.b16 %v827
    %v860 = vunpack.c.l.b16 %v828
    %v861 = vunpack.c.l.b16 %v829
    %v862 = vunpack.c.l.b16 %v830
    %v863 = vunpack.c.l.b16 %v831
    %v864 = vunpack.c.l.b16 %v832
    %v865 = vpack.c.b16 %v850, %v849
    %v866 = vpack.c.b16 %v852, %v851
    %v867 = vpack.c.b16 %v854, %v853
    %v868 = vpack.c.b16 %v856, %v855
    %v869 = vpack.c.b16 %v858, %v857
    %v870 = vpack.c.b16 %v860, %v859
    %v871 = vpack.c.b16 %v862, %v861
    %v872 = vpack.c.b16 %v864, %v863
    %881 = vmatpush.bf16.msra.mxu0 %v872
    %882 = vmatpush.bf16.msra.mxu0 %v871
    %883 = vmatpush.bf16.msra.mxu0 %v870
    %884 = vmatpush.bf16.msra.mxu0 %v869
    %885 = vmatpush.bf16.msra.mxu0 %v868
    %886 = vmatpush.bf16.msra.mxu0 %v867
    %887 = vmatpush.bf16.msra.mxu0 %v866
    %888 = vmatpush.bf16.msra.mxu0 %v865
    %889 = vmatmul.bf16.gmra.mxu0 %v816
    %v890 = vpop.f32.mrf.mxu0
    %v891 = vadd.f32 0.0, %v890
    %v892 = vpop.f32.mrf.mxu0
    %v893 = vadd.f32 0.0, %v892
    %894 = vdwg.mxu0
    %v895 = vld [vmem:[#allocation2] sm:$0x1]
    %v897 = vperm.slane %v895, 0
    %v899 = vadd.f32 %v891, %v897
    %v900 = vadd.f32 %v893, %v897
    %vm901 = vcmask 7168
    %902 = vst.msk [vmem:[%s9] sm:$0xff] %vm901, %v899
    %903 = vst.msk [vmem:[%s9 + $0x8] sm:$0xff] %vm901, %v900
    // Predicated region
    $region58: #{tpu_custom_call.1} parent=1 // pred_check
      _
    $region59: #{tpu_custom_call.1} parent=1 // pred_check_branch
      %905 = sbr.rel (0) target = $region61
    $region60: #{tpu_custom_call.1} parent=1 // pred_region
      _
    $region61: #{tpu_custom_call.1} parent=1 // pred_fallthru
      _
    // Predicated region
    $region62: #{tpu_custom_call.1} parent=1 // pred_check
      _
    $region63: #{tpu_custom_call.1} parent=1 // pred_check_branch
      %907 = sbr.rel (0) target = $region65
    $region64: #{tpu_custom_call.1} parent=1 // pred_region
      _
    $region65: #{tpu_custom_call.1} parent=1 // pred_fallthru
      _
    %908 = vsyncpa [#allocation4], 1
    %909 = vsyncpa [#allocation6], 1
    %910 = vsyncpa [#allocation9], 1

</llo_original>
